<compile_context>
chip_gen: v7x
topology: tpu7x:2x2x1
jax: 0.10.0
libtpu: 0.0.40
codegen_flags: <defaults>
</compile_context>

<pallas_src>
import jax
import jax.numpy as jnp
from jax.experimental import pallas as pl
from jax.experimental.pallas import tpu as pltpu


_NEG_SLOPE = 0.01
_TARGET_BLOCK_BYTES = 2 << 20  # ~2 MiB per block: 4 x block (in+out, 2 bufs) = 8 MiB


def _leaky_relu_kernel(x_ref, o_ref):
    x = x_ref[...]
    o_ref[...] = jnp.where(x >= 0, x, x * jnp.asarray(_NEG_SLOPE, x.dtype))


def _leaky_relu_2d(x2: jax.Array) -> jax.Array:
    """Run the elementwise kernel over a lane-dense (rows, cols) slab."""
    rows, cols = x2.shape
    dtype_bytes = jnp.dtype(x2.dtype).itemsize

    # Pick block rows by bytes (~2 MiB).  Small slabs -> single full block.
    if rows <= 8 or rows * cols * dtype_bytes <= _TARGET_BLOCK_BYTES:
        tr = rows  # block == full rows dim -> always a legal block shape
    else:
        tr = _TARGET_BLOCK_BYTES // (cols * dtype_bytes)
        tr = max(8, (tr // 8) * 8)  # multiple of 8 sublanes
        tr = min(tr, rows)

    grid = (pl.cdiv(rows, tr),)  # ragged last block masked by Pallas (elementwise-safe)

    return pl.pallas_call(
        _leaky_relu_kernel,
        out_shape=jax.ShapeDtypeStruct((rows, cols), x2.dtype),
        grid=grid,
        in_specs=[pl.BlockSpec((tr, cols), lambda i: (i, 0))],
        out_specs=pl.BlockSpec((tr, cols), lambda i: (i, 0)),
        compiler_params=pltpu.CompilerParams(
            dimension_semantics=("parallel",),   # shards across v7x's 2 TCs; no-op on v5e/v6e
            vmem_limit_bytes=48 << 20,           # raise v5e's 16 MiB default; < v7x's 64 MiB
        ),
    )(x2)


def custom_leaky_relu(x: jax.Array) -> jax.Array:
    """Pallas TPU implementation of CustomLeakyReLU.forward (elementwise)."""
    orig_shape = x.shape
    n = x.size
    if n == 0:
        return x

    x_flat = x.reshape(-1)  # reshape of a contiguous array: no HBM copy

    # Pick the largest lane width (multiple of 128, capped at 2048) dividing n.
    lanes = None
    for cand in (2048, 1024, 512, 256, 128):
        if n % cand == 0:
            lanes = cand
            break

    if lanes is not None:
        out2 = _leaky_relu_2d(x_flat.reshape(-1, lanes))
        return out2.reshape(orig_shape)

    # Rare ragged case (total elements not a multiple of 128): lane-dense main
    # slab through the kernel, tiny (<128 elem) tail in plain jnp.
    main = (n // 128) * 128
    if main == 0:
        return jnp.where(x >= 0, x, x * jnp.asarray(_NEG_SLOPE, x.dtype))
    head = _leaky_relu_2d(x_flat[:main].reshape(-1, 128)).reshape(-1)
    tail = x_flat[main:]
    tail = jnp.where(tail >= 0, tail, tail * jnp.asarray(_NEG_SLOPE, tail.dtype))
    return jnp.concatenate([head, tail]).reshape(orig_shape)


if __name__ == "__main__":
    key = jax.random.PRNGKey(0)
    # Small NCHW input consistent with a conv-style activation: (B, C, H, W)
    x = jax.random.normal(key, (2, 4, 16, 16), dtype=jnp.float32)

    out = custom_leaky_relu(x)
    out = jax.block_until_ready(out)

    # Sanity check against pure-JAX reference.
    ref = jnp.where(x >= 0, x, 0.01 * x)
    assert out.shape == x.shape and out.dtype == x.dtype
    assert jnp.allclose(out, ref, atol=1e-6), "mismatch vs reference"

    print("KERNEL_OK")
</pallas_src>

<mosaic_0001>
module attributes {stable_mosaic.version = 11 : i64} {
  func.func @_leaky_relu_kernel(%arg0: i32, %arg1: memref<1x2048xf32, #tpu.memory_space<vmem>>, %arg2: memref<1x2048xf32, #tpu.memory_space<vmem>>) attributes {dimension_semantics = [#tpu.dimension_semantics<parallel>], iteration_bounds = array<i64: 1>, scalar_prefetch = 0 : i64, scratch_operands = 0 : i64, tpu.core_type = #tpu.core_type<tc>, window_params = [{transform_indices = @transform_0, window_bounds = array<i64: 1, 2048>}, {transform_indices = @transform_1, window_bounds = array<i64: 1, 2048>}]} {
    %c0 = arith.constant 0 : index
    %c0_0 = arith.constant 0 : index
    %0 = vector.load %arg1[%c0, %c0_0] : memref<1x2048xf32, #tpu.memory_space<vmem>>, vector<1x2048xf32>
    %cst = arith.constant 0.000000e+00 : f32
    %1 = vector.broadcast %cst : f32 to vector<1x2048xf32>
    %2 = arith.cmpf oge, %0, %1 : vector<1x2048xf32>
    %cst_1 = arith.constant 0.00999999977 : f32
    %3 = vector.broadcast %cst_1 : f32 to vector<1x2048xf32>
    %4 = arith.mulf %0, %3 : vector<1x2048xf32>
    %5 = arith.select %2, %0, %4 : vector<1x2048xi1>, vector<1x2048xf32>
    %c0_2 = arith.constant 0 : index
    %c0_3 = arith.constant 0 : index
    %6 = vector.load %arg2[%c0_2, %c0_3] : memref<1x2048xf32, #tpu.memory_space<vmem>>, vector<1x2048xf32>
    tpu.vector_store %arg2[%c0_2, %c0_3], %5 {strides = array<i32>} : memref<1x2048xf32, #tpu.memory_space<vmem>>, vector<1x2048xf32>,
    return
  }
  func.func @transform_0(%arg0: i32) -> (i32, i32) {
    %c0_i32 = arith.constant 0 : i32
    %c0_i32_0 = arith.constant 0 : i32
    return %arg0, %c0_i32 : i32, i32
  }
  func.func @transform_1(%arg0: i32) -> (i32, i32) {
    %c0_i32 = arith.constant 0 : i32
    %c0_i32_0 = arith.constant 0 : i32
    return %arg0, %c0_i32 : i32, i32
  }
}

</mosaic_0001>

<llo_original>
// kernel: tpu_custom_call.1
$region0: #{tpu_custom_call.1}
  #allocation0 [shape = 'u32[]', space=smem, size = 0x4, offset = 0x4, fixed_abs, tag = 'smem constant byte address 0x4 - core index']
  #allocation1 [shape = 'u32[144,128]{1,0:T(1,128)}', space=vmem, size = 0x12000, scoped, tag = 'internal scratch']
  %s0 = inlined_call_operand.hbm [shape: f32[1,2048], index: 0, kind: input, shape index: {}]
  %s1 = inlined_call_operand.hbm [shape: f32[1,2048], index: 1, kind: output, shape index: {}]
  %s2 = sld [smem:[#allocation0]]
  $region18: #{tpu_custom_call.1} parent=0
    _
  %s4 = ssub.s32 1, %s2
  %s5 = scalar_select 0, %s4, %s2
  $region1: #{tpu_custom_call.1} parent=0
    #allocation2 [shape = 'u8[8192]{0}', space=vmem, size = 0x2000, scoped, tag = 'input window, operand 0, single buffered']
    #allocation3 [shape = 's32[1]{0}', space=sflag, size = 0x4, scoped, tag = 'scoped memory for tpu_custom_call.1']
    #allocation4 [shape = 's32[1]{0}', space=sflag, size = 0x4, scoped, tag = 'scoped memory for tpu_custom_call.1']
    #allocation5 [shape = 'u8[8192]{0}', space=vmem, size = 0x2000, scoped, tag = 'output window, operand 0, single buffered']
    %6 = vsyncpa [#allocation3], 0
    %7 = vsyncpa [#allocation4], 0
    // Predicated region
    $region2: #{tpu_custom_call.1} parent=1 // pred_check
      _
    $region3: #{tpu_custom_call.1} parent=1 // pred_check_branch
      %9 = sbr.rel (0) target = $region5
    $region4: #{tpu_custom_call.1} parent=1 // pred_region
      %s11 = ssub.s32 256, 256
      %12 = vsyncadd [#allocation3], %s11
      %s14 = sshll.u32 [#allocation2], 4
      %s15 = int_to_ptr.vmem [resolvable:$true] %s14
      %17 = dma.hbm_to_vmem [thread:$0]  %s0, 256, %s15, [#allocation3]
    $region5: #{tpu_custom_call.1} parent=1 // pred_fallthru
      _
    // Predicated region
    $region6: #{tpu_custom_call.1} parent=1 // pred_check
      _
    $region7: #{tpu_custom_call.1} parent=1 // pred_check_branch
      %19 = sbr.rel (0) target = $region9
    $region8: #{tpu_custom_call.1} parent=1 // pred_region
      %20 = dma.done [#allocation3], 256
    $region9: #{tpu_custom_call.1} parent=1 // pred_fallthru
      _
    %v21 = vld [vmem:[#allocation2] sm:$0xff]
    %v22 = vld [vmem:[#allocation2 + $0x8] sm:$0xff]
    %vm23 = vcmp.ge.f32.partialorder %v21, 0.0
    %vm24 = vcmp.ge.f32.partialorder %v22, 0.0
    %v25 = vmul.f32 %v21, 0.01
    %v26 = vmul.f32 %v22, 0.01
    %v27 = vsel %vm23, %v21, %v25
    %v28 = vsel %vm24, %v22, %v26
    %29 = vst [vmem:[#allocation5] sm:$0xff] %v27
    %30 = vst [vmem:[#allocation5 + $0x8] sm:$0xff] %v28
    // Predicated region
    $region10: #{tpu_custom_call.1} parent=1 // pred_check
      _
    $region11: #{tpu_custom_call.1} parent=1 // pred_check_branch
      %32 = sbr.rel (0) target = $region13
    $region12: #{tpu_custom_call.1} parent=1 // pred_region
      %s34 = ssub.s32 256, 256
      %35 = vsyncadd [#allocation4], %s34
      %s37 = sshll.u32 [#allocation5], 4
      %s38 = int_to_ptr.vmem [resolvable:$true] %s37
      %40 = dma.vmem_to_hbm [thread:$0]  %s38, 256, %s1, [#allocation4]
    $region13: #{tpu_custom_call.1} parent=1 // pred_fallthru
      _
    // Predicated region
    $region14: #{tpu_custom_call.1} parent=1 // pred_check
      _
    $region15: #{tpu_custom_call.1} parent=1 // pred_check_branch
      %42 = sbr.rel (0) target = $region17
    $region16: #{tpu_custom_call.1} parent=1 // pred_region
      %43 = dma.done [#allocation4], 256
    $region17: #{tpu_custom_call.1} parent=1 // pred_fallthru
      _
    %44 = vsyncpa [#allocation3], 1
    %45 = vsyncpa [#allocation4], 1

</llo_original>
